<compile_context>
chip_gen: v7x
topology: tpu7x:2x2x1
jax: 0.10.0
libtpu: 0.0.40
codegen_flags: <defaults>
</compile_context>

<pallas_src>
import jax
import jax.numpy as jnp
from jax.experimental import pallas as pl
from jax.experimental.pallas import tpu as pltpu

N_EMBD = 32
HIDDEN = 4 * N_EMBD  # 128
LANES = 128


def ffn_kernel(x_ref, w1_ref, b1_ref, w2_ref, b2_ref, o_ref):
    # x_ref : (tm, pack*D)       lane-dense packed tokens (pack tokens per row)
    # w1_ref: (pack*D, pack*H)   block-diagonal replication of W1
    # b1_ref: (1, pack*H)        f32
    # w2_ref: (pack*H, pack*D)   block-diagonal replication of W2
    # b2_ref: (1, pack*D)        f32
    x = x_ref[...]
    h = jnp.dot(x, w1_ref[...], preferred_element_type=jnp.float32)
    h = jnp.maximum(h + b1_ref[...], 0.0)              # bias + ReLU kept in f32
    y = jnp.dot(h.astype(w2_ref.dtype), w2_ref[...],
                preferred_element_type=jnp.float32)
    o_ref[...] = (y + b2_ref[...]).astype(o_ref.dtype)


def _block_diag(w, reps):
    """(in, out) -> (reps*in, reps*out) block-diagonal replication of w."""
    if reps == 1:
        return w
    in_f, out_f = w.shape
    eye = jnp.eye(reps, dtype=w.dtype)
    bd = jnp.einsum("ij,kl->ikjl", eye, w)             # (reps, in, reps, out)
    return bd.reshape(reps * in_f, reps * out_f)


def pack_params(w1, b1, w2, b2, *, compute_dtype=jnp.bfloat16):
    """Precompute lane-dense block-diagonal weights / tiled biases ONCE.

    Hoists the eye-einsum + dtype casts out of the per-call path; cache the
    result and pass it as `packed=` to feed_forward for repeated calls.
    """
    D, H = w1.shape
    pack = LANES // D if LANES % D == 0 else 1
    w1s = _block_diag(w1.astype(compute_dtype), pack)          # (pack*D, pack*H)
    w2s = _block_diag(w2.astype(compute_dtype), pack)          # (pack*H, pack*D)
    b1s = jnp.tile(b1.astype(jnp.float32).reshape(1, H), (1, pack))  # (1, pack*H)
    b2s = jnp.tile(b2.astype(jnp.float32).reshape(1, D), (1, pack))  # (1, pack*D)
    return w1s, b1s, w2s, b2s


def feed_forward(x, w1=None, b1=None, w2=None, b2=None, *, packed=None,
                 tm=1024, compute_dtype=jnp.bfloat16, out_dtype=None):
    """x: (..., n_embd). Weights stored (in, out) so the kernel computes x @ W + b
    (matches PyTorch y = x @ W.T + b with W = weight.T).

    packed        : output of pack_params() (precompute once per layer). If
                    None, it is built here (fine for one-off calls).
    tm            : packed-row tile; each packed row holds 128//n_embd tokens,
                    so tm=1024 => 4096 tokens per grid step.
    compute_dtype : dtype fed to the MXU (default bf16). Accumulation, bias and
                    ReLU stay f32. Ignored when `packed` is supplied (the
                    packed weights' dtype is used).
    out_dtype     : output dtype (default x.dtype; bf16 halves writeback bytes).
    """
    D = x.shape[-1]
    out_dt = jnp.dtype(out_dtype if out_dtype is not None else x.dtype)

    if packed is None:
        packed = pack_params(w1, b1, w2, b2, compute_dtype=compute_dtype)
    w1s, b1s, w2s, b2s = packed
    cd = w1s.dtype
    pack = w1s.shape[0] // D
    H = w1s.shape[1] // pack

    # bf16 min tile is (16,128); only the pure-f32 path may use 8-row tiles.
    row_min = 8 if (jnp.dtype(cd).itemsize >= 4 and out_dt.itemsize >= 4) else 16

    M = x.size // D
    mp = pl.cdiv(M, pack)                                   # packed rows needed
    tm_eff = min(tm, pl.cdiv(mp, row_min) * row_min)        # don't over-pad tiny inputs
    if mp >= 2 * row_min:
        # v7x megacore: keep >= 2 grid steps so both TensorCores get work.
        tm_eff = min(tm_eff, pl.cdiv(pl.cdiv(mp, 2), row_min) * row_min)
    tm_eff = max(row_min, tm_eff)
    mp_pad = pl.cdiv(mp, tm_eff) * tm_eff
    m_pad = mp_pad * pack

    # Cast to compute dtype BEFORE the pad + (M,D)->(M/pack,128) relayout so the
    # wrapper-side copies move narrow data.
    x2 = x.reshape(M, D).astype(cd)
    if m_pad != M:
        x2 = jnp.pad(x2, ((0, m_pad - M), (0, 0)))
    xp = x2.reshape(mp_pad, pack * D)

    itemsize = jnp.dtype(cd).itemsize
    # Executed FLOPs of the block-diagonal matmuls (zeros still flow through MXU).
    cost = pl.CostEstimate(
        flops=int(4 * mp_pad * (pack * D) * (pack * H)),
        transcendentals=0,
        bytes_accessed=int(mp_pad * pack * D * itemsize              # x in
                           + mp_pad * pack * D * out_dt.itemsize     # out
                           + (w1s.size + w2s.size) * itemsize
                           + (b1s.size + b2s.size) * 4),
    )

    # Rough VMEM budget: double-buffered in/out tiles + f32 hidden temp + weights.
    x_blk = tm_eff * pack * D * itemsize
    o_blk = tm_eff * pack * D * out_dt.itemsize
    h_tmp = tm_eff * pack * H * 4
    w_bytes = (w1s.size + w2s.size) * itemsize + (b1s.size + b2s.size) * 4
    vmem_est = 2 * x_blk + 2 * o_blk + h_tmp + 2 * w_bytes
    vmem_limit = None
    if vmem_est > 14 * 1024 * 1024:                         # v5e default ~16 MiB scoped
        vmem_limit = int(min(vmem_est * 3 // 2, 100 * 1024 * 1024))

    out = pl.pallas_call(
        ffn_kernel,
        out_shape=jax.ShapeDtypeStruct((mp_pad, pack * D), out_dt),
        grid_spec=pltpu.PrefetchScalarGridSpec(
            num_scalar_prefetch=0,
            grid=(mp_pad // tm_eff,),
            in_specs=[
                pl.BlockSpec((tm_eff, pack * D), lambda i: (i, 0)),    # packed x rows
                pl.BlockSpec((pack * D, pack * H), lambda i: (0, 0)),  # W1 (resident)
                pl.BlockSpec((1, pack * H), lambda i: (0, 0)),         # b1
                pl.BlockSpec((pack * H, pack * D), lambda i: (0, 0)),  # W2 (resident)
                pl.BlockSpec((1, pack * D), lambda i: (0, 0)),         # b2
            ],
            out_specs=pl.BlockSpec((tm_eff, pack * D), lambda i: (i, 0)),
        ),
        compiler_params=pltpu.CompilerParams(
            dimension_semantics=("parallel",),
            vmem_limit_bytes=vmem_limit,
        ),
        cost_estimate=cost,
    )(xp, w1s, b1s, w2s, b2s)

    return out.reshape(m_pad, D)[:M].reshape(x.shape[:-1] + (D,))


def init_params(key, n_embd=N_EMBD):
    """Deterministic init mirroring nn.Linear defaults (uniform +/- 1/sqrt(fan_in))."""
    hidden = 4 * n_embd
    k1, k2, k3, k4 = jax.random.split(key, 4)
    bound1 = 1.0 / jnp.sqrt(n_embd)
    bound2 = 1.0 / jnp.sqrt(hidden)
    # stored as (in, out) so the kernel does x @ W
    w1 = jax.random.uniform(k1, (n_embd, hidden), jnp.float32, -bound1, bound1)
    b1 = jax.random.uniform(k2, (1, hidden), jnp.float32, -bound1, bound1)
    w2 = jax.random.uniform(k3, (hidden, n_embd), jnp.float32, -bound2, bound2)
    b2 = jax.random.uniform(k4, (1, n_embd), jnp.float32, -bound2, bound2)
    return w1, b1, w2, b2


if __name__ == "__main__":
    key = jax.random.PRNGKey(0)
    kx, kp = jax.random.split(key)

    B, T = 2, 8
    x = jax.random.normal(kx, (B, T, N_EMBD), dtype=jnp.float32)
    w1, b1, w2, b2 = init_params(kp)

    # plain-JAX reference
    x2 = x.reshape(-1, N_EMBD)
    ref = (jnp.maximum(x2 @ w1 + b1, 0.0) @ w2 + b2).reshape(B, T, N_EMBD)

    # Packed weights precomputed once (hoisted out of the per-call path).
    packed_f32 = pack_params(w1, b1, w2, b2, compute_dtype=jnp.float32)
    packed_bf16 = pack_params(w1, b1, w2, b2, compute_dtype=jnp.bfloat16)

    # f32 compute path (exact semantics of the PyTorch module)
    y = jax.block_until_ready(feed_forward(x, packed=packed_f32))
    assert y.shape == (B, T, N_EMBD)
    assert jnp.allclose(y, ref, atol=1e-5, rtol=1e-5)

    # default bf16 MXU inputs / f32 accumulation (recommended on all gens: HBM-bound)
    y_bf16 = jax.block_until_ready(feed_forward(x, packed=packed_bf16))
    assert y_bf16.dtype == x.dtype
    assert jnp.allclose(y_bf16, ref, atol=1e-1, rtol=5e-2)

    # bf16 output cuts writeback bytes (v6e/v7x); downstream must accept bf16
    y_bf16_out = jax.block_until_ready(
        feed_forward(x, packed=packed_bf16, out_dtype=jnp.bfloat16))
    assert y_bf16_out.dtype == jnp.bfloat16
    assert jnp.allclose(y_bf16_out.astype(jnp.float32), ref, atol=1e-1, rtol=5e-2)

    # odd token count exercises the cdiv/pad path
    x_odd = jax.random.normal(kx, (3, 7, N_EMBD), dtype=jnp.float32)
    y_odd = jax.block_until_ready(feed_forward(x_odd, packed=packed_f32))
    x2o = x_odd.reshape(-1, N_EMBD)
    ref_odd = (jnp.maximum(x2o @ w1 + b1, 0.0) @ w2 + b2).reshape(3, 7, N_EMBD)
    assert jnp.allclose(y_odd, ref_odd, atol=1e-5, rtol=1e-5)

    # un-packed convenience path (builds packed weights per call)
    y_raw = jax.block_until_ready(
        feed_forward(x, w1, b1, w2, b2, compute_dtype=jnp.float32))
    assert jnp.allclose(y_raw, ref, atol=1e-5, rtol=1e-5)

    print("KERNEL_OK")
</pallas_src>

<mosaic_0001>
module attributes {stable_mosaic.version = 11 : i64} {
  func.func @ffn_kernel(%arg0: i32, %arg1: memref<8x128xf32, #tpu.memory_space<vmem>>, %arg2: memref<128x512xf32, #tpu.memory_space<vmem>>, %arg3: memref<1x512xf32, #tpu.memory_space<vmem>>, %arg4: memref<512x128xf32, #tpu.memory_space<vmem>>, %arg5: memref<1x128xf32, #tpu.memory_space<vmem>>, %arg6: memref<8x128xf32, #tpu.memory_space<vmem>>) attributes {dimension_semantics = [#tpu.dimension_semantics<parallel>], iteration_bounds = array<i64: 1>, scalar_prefetch = 0 : i64, scratch_operands = 0 : i64, tpu.core_type = #tpu.core_type<tc>, window_params = [{transform_indices = @transform_0, window_bounds = array<i64: 8, 128>}, {pipeline_mode = #tpu.pipeline_mode<synchronous>, transform_indices = @transform_1, window_bounds = array<i64: 128, 512>}, {pipeline_mode = #tpu.pipeline_mode<synchronous>, transform_indices = @transform_2, window_bounds = array<i64: 1, 512>}, {pipeline_mode = #tpu.pipeline_mode<synchronous>, transform_indices = @transform_3, window_bounds = array<i64: 512, 128>}, {pipeline_mode = #tpu.pipeline_mode<synchronous>, transform_indices = @transform_4, window_bounds = array<i64: 1, 128>}, {transform_indices = @transform_5, window_bounds = array<i64: 8, 128>}]} {
    %c0 = arith.constant 0 : index
    %c0_0 = arith.constant 0 : index
    %0 = vector.load %arg1[%c0, %c0_0] : memref<8x128xf32, #tpu.memory_space<vmem>>, vector<8x128xf32>
    %c0_1 = arith.constant 0 : index
    %c0_2 = arith.constant 0 : index
    %1 = vector.load %arg2[%c0_1, %c0_2] : memref<128x512xf32, #tpu.memory_space<vmem>>, vector<128x512xf32>
    %cst = arith.constant dense<0.000000e+00> : vector<8x512xf32>
    %2 = tpu.matmul %0, %1, %cst {dimension_numbers = #tpu.dot_dimension_numbers<[1], [0], [0], [1], [0, 0, 1, 1], [], []>} : vector<8x128xf32>, vector<128x512xf32>, vector<8x512xf32> -> vector<8x512xf32>
    %c0_3 = arith.constant 0 : index
    %c0_4 = arith.constant 0 : index
    %3 = vector.load %arg3[%c0_3, %c0_4] : memref<1x512xf32, #tpu.memory_space<vmem>>, vector<1x512xf32>
    %4 = vector.broadcast %3 : vector<1x512xf32> to vector<8x512xf32>
    %5 = arith.addf %2, %4 : vector<8x512xf32>
    %cst_5 = arith.constant 0.000000e+00 : f32
    %6 = vector.broadcast %cst_5 : f32 to vector<8x512xf32>
    %7 = arith.maximumf %5, %6 : vector<8x512xf32>
    %c0_6 = arith.constant 0 : index
    %c0_7 = arith.constant 0 : index
    %8 = vector.load %arg4[%c0_6, %c0_7] : memref<512x128xf32, #tpu.memory_space<vmem>>, vector<512x128xf32>
    %cst_8 = arith.constant dense<0.000000e+00> : vector<8x128xf32>
    %9 = tpu.matmul %7, %8, %cst_8 {dimension_numbers = #tpu.dot_dimension_numbers<[1], [0], [0], [1], [0, 0, 1, 1], [], []>} : vector<8x512xf32>, vector<512x128xf32>, vector<8x128xf32> -> vector<8x128xf32>
    %c0_9 = arith.constant 0 : index
    %c0_10 = arith.constant 0 : index
    %10 = vector.load %arg5[%c0_9, %c0_10] : memref<1x128xf32, #tpu.memory_space<vmem>>, vector<1x128xf32>
    %11 = vector.broadcast %10 : vector<1x128xf32> to vector<8x128xf32>
    %12 = arith.addf %9, %11 : vector<8x128xf32>
    %c0_11 = arith.constant 0 : index
    %c0_12 = arith.constant 0 : index
    %13 = vector.load %arg6[%c0_11, %c0_12] : memref<8x128xf32, #tpu.memory_space<vmem>>, vector<8x128xf32>
    tpu.vector_store %arg6[%c0_11, %c0_12], %12 {strides = array<i32>} : memref<8x128xf32, #tpu.memory_space<vmem>>, vector<8x128xf32>,
    return
  }
  func.func @transform_0(%arg0: i32) -> (i32, i32) {
    %c0_i32 = arith.constant 0 : i32
    %c0_i32_0 = arith.constant 0 : i32
    return %arg0, %c0_i32 : i32, i32
  }
  func.func @transform_1(%arg0: i32) -> (i32, i32) {
    %c0_i32 = arith.constant 0 : i32
    %c0_i32_0 = arith.constant 0 : i32
    %c0_i32_1 = arith.constant 0 : i32
    return %c0_i32, %c0_i32_0 : i32, i32
  }
  func.func @transform_2(%arg0: i32) -> (i32, i32) {
    %c0_i32 = arith.constant 0 : i32
    %c0_i32_0 = arith.constant 0 : i32
    %c0_i32_1 = arith.constant 0 : i32
    return %c0_i32, %c0_i32_0 : i32, i32
  }
  func.func @transform_3(%arg0: i32) -> (i32, i32) {
    %c0_i32 = arith.constant 0 : i32
    %c0_i32_0 = arith.constant 0 : i32
    %c0_i32_1 = arith.constant 0 : i32
    return %c0_i32, %c0_i32_0 : i32, i32
  }
  func.func @transform_4(%arg0: i32) -> (i32, i32) {
    %c0_i32 = arith.constant 0 : i32
    %c0_i32_0 = arith.constant 0 : i32
    %c0_i32_1 = arith.constant 0 : i32
    return %c0_i32, %c0_i32_0 : i32, i32
  }
  func.func @transform_5(%arg0: i32) -> (i32, i32) {
    %c0_i32 = arith.constant 0 : i32
    %c0_i32_0 = arith.constant 0 : i32
    return %arg0, %c0_i32 : i32, i32
  }
}

</mosaic_0001>

<llo_original>
// kernel: tpu_custom_call.1
$region0: #{tpu_custom_call.1}
  #allocation0 [shape = 'u32[]', space=smem, size = 0x4, offset = 0x4, fixed_abs, tag = 'smem constant byte address 0x4 - core index']
  #allocation1 [shape = 'u32[144,128]{1,0:T(1,128)}', space=vmem, size = 0x12000, scoped, tag = 'internal scratch']
  %s0 = inlined_call_operand.hbm [shape: f32[8,128], index: 0, kind: input, shape index: {}]
  %s1 = inlined_call_operand.hbm [shape: f32[128,512], index: 1, kind: input, shape index: {}]
  %s2 = inlined_call_operand.vmem [shape: f32[1,512], index: 2, kind: input, shape index: {}]
  %s3 = inlined_call_operand.hbm [shape: f32[512,128], index: 3, kind: input, shape index: {}]
  %s4 = inlined_call_operand.vmem [shape: f32[1,128], index: 4, kind: input, shape index: {}]
  %s5 = inlined_call_operand.hbm [shape: f32[8,128], index: 5, kind: output, shape index: {}]
  %s6 = sld [smem:[#allocation0]]
  $region42: #{tpu_custom_call.1} parent=0
    _
  %s8 = ssub.s32 1, %s6
  %s9 = scalar_select 0, %s8, %s6
  $region1: #{tpu_custom_call.1} parent=0
    #allocation2 [shape = 'u8[4096]{0}', space=vmem, size = 0x1000, scoped, tag = 'input window, operand 0, single buffered']
    #allocation3 [shape = 's32[1]{0}', space=sflag, size = 0x4, scoped, tag = 'scoped memory for tpu_custom_call.1']
    #allocation4 [shape = 's32[1]{0}', space=sflag, size = 0x4, scoped, tag = 'scoped memory for tpu_custom_call.1']
    #allocation5 [shape = 'u8[262144]{0}', space=vmem, size = 0x40000, scoped, tag = 'input window, operand 1, single buffered']
    #allocation6 [shape = 's32[1]{0}', space=sflag, size = 0x4, scoped, tag = 'scoped memory for tpu_custom_call.1']
    #allocation7 [shape = 'u8[262144]{0}', space=vmem, size = 0x40000, scoped, tag = 'input window, operand 3, single buffered']
    #allocation8 [shape = 'u8[4096]{0}', space=vmem, size = 0x1000, scoped, tag = 'output window, operand 0, single buffered']
    %10 = vsyncpa [#allocation3], 0
    %11 = vsyncpa [#allocation6], 0
    %12 = vsyncpa [#allocation4], 0
    // Predicated region
    $region2: #{tpu_custom_call.1} parent=1 // pred_check
      _
    $region3: #{tpu_custom_call.1} parent=1 // pred_check_branch
      %14 = sbr.rel (0) target = $region5
    $region4: #{tpu_custom_call.1} parent=1 // pred_region
      %s16 = ssub.s32 128, 128
      %17 = vsyncadd [#allocation3], %s16
      %s19 = sshll.u32 [#allocation2], 4
      %s20 = int_to_ptr.vmem [resolvable:$true] %s19
      %22 = dma.hbm_to_vmem [thread:$0]  %s0, 128, %s20, [#allocation3]
    $region5: #{tpu_custom_call.1} parent=1 // pred_fallthru
      _
    // Predicated region
    $region6: #{tpu_custom_call.1} parent=1 // pred_check
      _
    $region7: #{tpu_custom_call.1} parent=1 // pred_check_branch
      %24 = sbr.rel (0) target = $region9
    $region8: #{tpu_custom_call.1} parent=1 // pred_region
      %s26 = ssub.s32 8192, 8192
      %27 = vsyncadd [#allocation6], %s26
      %s28 = sshll.u32 [#allocation5], 4
      %s29 = int_to_ptr.vmem [resolvable:$true] %s28
      %34 = dma.hbm_to_vmem [thread:$0]  %s1, 8192, %s29, [#allocation6], 512, 512, 32
    $region9: #{tpu_custom_call.1} parent=1 // pred_fallthru
      _
    // Predicated region
    $region10: #{tpu_custom_call.1} parent=1 // pred_check
      _
    $region11: #{tpu_custom_call.1} parent=1 // pred_check_branch
      %36 = sbr.rel (0) target = $region13
    $region12: #{tpu_custom_call.1} parent=1 // pred_region
      _
    $region13: #{tpu_custom_call.1} parent=1 // pred_fallthru
      _
    // Predicated region
    $region14: #{tpu_custom_call.1} parent=1 // pred_check
      _
    $region15: #{tpu_custom_call.1} parent=1 // pred_check_branch
      %38 = sbr.rel (0) target = $region17
    $region16: #{tpu_custom_call.1} parent=1 // pred_region
      %s40 = ssub.s32 8192, 8192
      %41 = vsyncadd [#allocation6], %s40
      %s42 = sshll.u32 [#allocation7], 4
      %s43 = int_to_ptr.vmem [resolvable:$true] %s42
      %48 = dma.hbm_to_vmem [thread:$0]  %s3, 8192, %s43, [#allocation6], 128, 128, 8
    $region17: #{tpu_custom_call.1} parent=1 // pred_fallthru
      _
    // Predicated region
    $region18: #{tpu_custom_call.1} parent=1 // pred_check
      _
    $region19: #{tpu_custom_call.1} parent=1 // pred_check_branch
      %50 = sbr.rel (0) target = $region21
    $region20: #{tpu_custom_call.1} parent=1 // pred_region
      _
    $region21: #{tpu_custom_call.1} parent=1 // pred_fallthru
      _
    // Predicated region
    $region22: #{tpu_custom_call.1} parent=1 // pred_check
      _
    $region23: #{tpu_custom_call.1} parent=1 // pred_check_branch
      %52 = sbr.rel (0) target = $region25
    $region24: #{tpu_custom_call.1} parent=1 // pred_region
      %53 = dma.done [#allocation3], 128
    $region25: #{tpu_custom_call.1} parent=1 // pred_fallthru
      _
    // Predicated region
    $region26: #{tpu_custom_call.1} parent=1 // pred_check
      _
    $region27: #{tpu_custom_call.1} parent=1 // pred_check_branch
      %55 = sbr.rel (0) target = $region29
    $region28: #{tpu_custom_call.1} parent=1 // pred_region
      %56 = dma.done [#allocation6], 8192
    $region29: #{tpu_custom_call.1} parent=1 // pred_fallthru
      _
    // Predicated region
    $region30: #{tpu_custom_call.1} parent=1 // pred_check
      _
    $region31: #{tpu_custom_call.1} parent=1 // pred_check_branch
      %58 = sbr.rel (0) target = $region33
    $region32: #{tpu_custom_call.1} parent=1 // pred_region
      %59 = dma.done [#allocation6], 8192
    $region33: #{tpu_custom_call.1} parent=1 // pred_fallthru
      _
    %v60 = vld [vmem:[#allocation2] sm:$0xff]
    %v61 = vld [vmem:[#allocation5] sm:$0xff]
    %v62 = vld [vmem:[#allocation5 + $0x8] sm:$0xff]
    %v63 = vld [vmem:[#allocation5 + $0x10] sm:$0xff]
    %v64 = vld [vmem:[#allocation5 + $0x18] sm:$0xff]
    %v65 = vld [vmem:[#allocation5 + $0x20] sm:$0xff]
    %v66 = vld [vmem:[#allocation5 + $0x28] sm:$0xff]
    %v67 = vld [vmem:[#allocation5 + $0x30] sm:$0xff]
    %v68 = vld [vmem:[#allocation5 + $0x38] sm:$0xff]
    %v69 = vld [vmem:[#allocation5 + $0x40] sm:$0xff]
    %v70 = vld [vmem:[#allocation5 + $0x48] sm:$0xff]
    %v71 = vld [vmem:[#allocation5 + $0x50] sm:$0xff]
    %v72 = vld [vmem:[#allocation5 + $0x58] sm:$0xff]
    %v73 = vld [vmem:[#allocation5 + $0x60] sm:$0xff]
    %v74 = vld [vmem:[#allocation5 + $0x68] sm:$0xff]
    %v75 = vld [vmem:[#allocation5 + $0x70] sm:$0xff]
    %v76 = vld [vmem:[#allocation5 + $0x78] sm:$0xff]
    %v77 = vld [vmem:[#allocation5 + $0x80] sm:$0xff]
    %v78 = vld [vmem:[#allocation5 + $0x88] sm:$0xff]
    %v79 = vld [vmem:[#allocation5 + $0x90] sm:$0xff]
    %v80 = vld [vmem:[#allocation5 + $0x98] sm:$0xff]
    %v81 = vld [vmem:[#allocation5 + $0xa0] sm:$0xff]
    %v82 = vld [vmem:[#allocation5 + $0xa8] sm:$0xff]
    %v83 = vld [vmem:[#allocation5 + $0xb0] sm:$0xff]
    %v84 = vld [vmem:[#allocation5 + $0xb8] sm:$0xff]
    %v85 = vld [vmem:[#allocation5 + $0xc0] sm:$0xff]
    %v86 = vld [vmem:[#allocation5 + $0xc8] sm:$0xff]
    %v87 = vld [vmem:[#allocation5 + $0xd0] sm:$0xff]
    %v88 = vld [vmem:[#allocation5 + $0xd8] sm:$0xff]
    %v89 = vld [vmem:[#allocation5 + $0xe0] sm:$0xff]
    %v90 = vld [vmem:[#allocation5 + $0xe8] sm:$0xff]
    %v91 = vld [vmem:[#allocation5 + $0xf0] sm:$0xff]
    %v92 = vld [vmem:[#allocation5 + $0xf8] sm:$0xff]
    %v93 = vld [vmem:[#allocation5 + $0x100] sm:$0xff]
    %v94 = vld [vmem:[#allocation5 + $0x108] sm:$0xff]
    %v95 = vld [vmem:[#allocation5 + $0x110] sm:$0xff]
    %v96 = vld [vmem:[#allocation5 + $0x118] sm:$0xff]
    %v97 = vld [vmem:[#allocation5 + $0x120] sm:$0xff]
    %v98 = vld [vmem:[#allocation5 + $0x128] sm:$0xff]
    %v99 = vld [vmem:[#allocation5 + $0x130] sm:$0xff]
    %v100 = vld [vmem:[#allocation5 + $0x138] sm:$0xff]
    %v101 = vld [vmem:[#allocation5 + $0x140] sm:$0xff]
    %v102 = vld [vmem:[#allocation5 + $0x148] sm:$0xff]
    %v103 = vld [vmem:[#allocation5 + $0x150] sm:$0xff]
    %v104 = vld [vmem:[#allocation5 + $0x158] sm:$0xff]
    %v105 = vld [vmem:[#allocation5 + $0x160] sm:$0xff]
    %v106 = vld [vmem:[#allocation5 + $0x168] sm:$0xff]
    %v107 = vld [vmem:[#allocation5 + $0x170] sm:$0xff]
    %v108 = vld [vmem:[#allocation5 + $0x178] sm:$0xff]
    %v109 = vld [vmem:[#allocation5 + $0x180] sm:$0xff]
    %v110 = vld [vmem:[#allocation5 + $0x188] sm:$0xff]
    %v111 = vld [vmem:[#allocation5 + $0x190] sm:$0xff]
    %v112 = vld [vmem:[#allocation5 + $0x198] sm:$0xff]
    %v113 = vld [vmem:[#allocation5 + $0x1a0] sm:$0xff]
    %v114 = vld [vmem:[#allocation5 + $0x1a8] sm:$0xff]
    %v115 = vld [vmem:[#allocation5 + $0x1b0] sm:$0xff]
    %v116 = vld [vmem:[#allocation5 + $0x1b8] sm:$0xff]
    %v117 = vld [vmem:[#allocation5 + $0x1c0] sm:$0xff]
    %v118 = vld [vmem:[#allocation5 + $0x1c8] sm:$0xff]
    %v119 = vld [vmem:[#allocation5 + $0x1d0] sm:$0xff]
    %v120 = vld [vmem:[#allocation5 + $0x1d8] sm:$0xff]
    %v121 = vld [vmem:[#allocation5 + $0x1e0] sm:$0xff]
    %v122 = vld [vmem:[#allocation5 + $0x1e8] sm:$0xff]
    %v123 = vld [vmem:[#allocation5 + $0x1f0] sm:$0xff]
    %v124 = vld [vmem:[#allocation5 + $0x1f8] sm:$0xff]
    %v125 = vld [vmem:[%s2] sm:$0xf]
    %v127 = vlaneseq
    %v128 = vshrl.u32 %v127, 7
    %v129 = vsub.s32 0, %v128
    %v130 = vrot.slane %v125, %v129
    %v131 = vlaneseq
    %v132 = vshrl.u32 %v131, 7
    %v133 = vsub.s32 1, %v132
    %v134 = vrot.slane %v125, %v133
    %v135 = vlaneseq
    %v136 = vshrl.u32 %v135, 7
    %v137 = vsub.s32 2, %v136
    %v138 = vrot.slane %v125, %v137
    %v139 = vlaneseq
    %v140 = vshrl.u32 %v139, 7
    %v141 = vsub.s32 3, %v140
    %v142 = vrot.slane %v125, %v141
    %147 = vmatprep.subr.mxu0 %v62
    %148 = vmatpush1.msra.mxu0 %v61
    %149 = vmatprep.subr.mxu0 %v66
    %150 = vmatpush1.msra.mxu0 %v65
    %151 = vmatprep.subr.mxu0 %v70
    %152 = vmatpush1.msra.mxu0 %v69
    %153 = vmatprep.subr.mxu0 %v74
    %154 = vmatpush1.msra.mxu0 %v73
    %155 = vmatprep.subr.mxu0 %v78
    %156 = vmatpush1.msra.mxu0 %v77
    %157 = vmatprep.subr.mxu0 %v82
    %158 = vmatpush1.msra.mxu0 %v81
    %159 = vmatprep.subr.mxu0 %v86
    %160 = vmatpush1.msra.mxu0 %v85
    %161 = vmatprep.subr.mxu0 %v90
    %162 = vmatpush1.msra.mxu0 %v89
    %163 = vmatprep.subr.mxu0 %v94
    %164 = vmatpush1.msra.mxu0 %v93
    %165 = vmatprep.subr.mxu0 %v98
    %166 = vmatpush1.msra.mxu0 %v97
    %167 = vmatprep.subr.mxu0 %v102
    %168 = vmatpush1.msra.mxu0 %v101
    %169 = vmatprep.subr.mxu0 %v106
    %170 = vmatpush1.msra.mxu0 %v105
    %171 = vmatprep.subr.mxu0 %v110
    %172 = vmatpush1.msra.mxu0 %v109
    %173 = vmatprep.subr.mxu0 %v114
    %174 = vmatpush1.msra.mxu0 %v113
    %175 = vmatprep.subr.mxu0 %v118
    %176 = vmatpush1.msra.mxu0 %v117
    %177 = vmatprep.subr.mxu0 %v122
    %178 = vmatpush1.msra.mxu0 %v121
    %179 = vmatprep.subr.mxu0 0.0
    %180 = vmatpush1.msra.mxu0 0.0
    %181 = vmatprep.subr.mxu0 0.0
    %182 = vmatpush1.msra.mxu0 0.0
    %183 = vmatprep.subr.mxu0 0.0
    %184 = vmatpush1.msra.mxu0 0.0
    %185 = vmatprep.subr.mxu0 0.0
    %186 = vmatpush1.msra.mxu0 0.0
    %187 = vmatprep.subr.mxu0 0.0
    %188 = vmatpush1.msra.mxu0 0.0
    %189 = vmatprep.subr.mxu0 0.0
    %190 = vmatpush1.msra.mxu0 0.0
    %191 = vmatprep.subr.mxu0 0.0
    %192 = vmatpush1.msra.mxu0 0.0
    %193 = vmatprep.subr.mxu0 0.0
    %194 = vmatpush1.msra.mxu0 0.0
    %195 = vmatprep.subr.mxu0 0.0
    %196 = vmatpush1.msra.mxu0 0.0
    %197 = vmatprep.subr.mxu0 0.0
    %198 = vmatpush1.msra.mxu0 0.0
    %199 = vmatprep.subr.mxu0 0.0
    %200 = vmatpush1.msra.mxu0 0.0
    %201 = vmatprep.subr.mxu0 0.0
    %202 = vmatpush1.msra.mxu0 0.0
    %203 = vmatprep.subr.mxu0 0.0
    %204 = vmatpush1.msra.mxu0 0.0
    %205 = vmatprep.subr.mxu0 0.0
    %206 = vmatpush1.msra.mxu0 0.0
    %207 = vmatprep.subr.mxu0 0.0
    %208 = vmatpush1.msra.mxu0 0.0
    %209 = vmatprep.subr.mxu0 0.0
    %210 = vmatpush1.msra.mxu0 0.0
    %211 = vmatprep.mubr.f32.mxu0 0.0
    %212 = vmatmul.mubr.f32.gmra.mrb[0].mxu0 %v60
    %v213 = vpop.f32.mrb[0].mxu0
    %v214 = vadd.f32 %v130, %v213
    %v215 = vpop.f32.mrb[0].mxu0
    %v216 = vadd.f32 %v134, %v215
    %217 = vdwg.mxu0
    %218 = vmatprep.subr.mxu0 %v64
    %219 = vmatpush1.msra.mxu0 %v63
    %220 = vmatprep.subr.mxu0 %v68
    %221 = vmatpush1.msra.mxu0 %v67
    %222 = vmatprep.subr.mxu0 %v72
    %223 = vmatpush1.msra.mxu0 %v71
    %224 = vmatprep.subr.mxu0 %v76
    %225 = vmatpush1.msra.mxu0 %v75
    %226 = vmatprep.subr.mxu0 %v80
    %227 = vmatpush1.msra.mxu0 %v79
    %228 = vmatprep.subr.mxu0 %v84
    %229 = vmatpush1.msra.mxu0 %v83
    %230 = vmatprep.subr.mxu0 %v88
    %231 = vmatpush1.msra.mxu0 %v87
    %232 = vmatprep.subr.mxu0 %v92
    %233 = vmatpush1.msra.mxu0 %v91
    %234 = vmatprep.subr.mxu0 %v96
    %235 = vmatpush1.msra.mxu0 %v95
    %236 = vmatprep.subr.mxu0 %v100
    %237 = vmatpush1.msra.mxu0 %v99
    %238 = vmatprep.subr.mxu0 %v104
    %239 = vmatpush1.msra.mxu0 %v103
    %240 = vmatprep.subr.mxu0 %v108
    %241 = vmatpush1.msra.mxu0 %v107
    %242 = vmatprep.subr.mxu0 %v112
    %243 = vmatpush1.msra.mxu0 %v111
    %244 = vmatprep.subr.mxu0 %v116
    %245 = vmatpush1.msra.mxu0 %v115
    %246 = vmatprep.subr.mxu0 %v120
    %247 = vmatpush1.msra.mxu0 %v119
    %248 = vmatprep.subr.mxu0 %v124
    %249 = vmatpush1.msra.mxu0 %v123
    %250 = vmatprep.subr.mxu0 0.0
    %251 = vmatpush1.msra.mxu0 0.0
    %252 = vmatprep.subr.mxu0 0.0
    %253 = vmatpush1.msra.mxu0 0.0
    %254 = vmatprep.subr.mxu0 0.0
    %255 = vmatpush1.msra.mxu0 0.0
    %256 = vmatprep.subr.mxu0 0.0
    %257 = vmatpush1.msra.mxu0 0.0
    %258 = vmatprep.subr.mxu0 0.0
    %259 = vmatpush1.msra.mxu0 0.0
    %260 = vmatprep.subr.mxu0 0.0
    %261 = vmatpush1.msra.mxu0 0.0
    %262 = vmatprep.subr.mxu0 0.0
    %263 = vmatpush1.msra.mxu0 0.0
    %264 = vmatprep.subr.mxu0 0.0
    %265 = vmatpush1.msra.mxu0 0.0
    %266 = vmatprep.subr.mxu0 0.0
    %267 = vmatpush1.msra.mxu0 0.0
    %268 = vmatprep.subr.mxu0 0.0
    %269 = vmatpush1.msra.mxu0 0.0
    %270 = vmatprep.subr.mxu0 0.0
    %271 = vmatpush1.msra.mxu0 0.0
    %272 = vmatprep.subr.mxu0 0.0
    %273 = vmatpush1.msra.mxu0 0.0
    %274 = vmatprep.subr.mxu0 0.0
    %275 = vmatpush1.msra.mxu0 0.0
    %276 = vmatprep.subr.mxu0 0.0
    %277 = vmatpush1.msra.mxu0 0.0
    %278 = vmatprep.subr.mxu0 0.0
    %279 = vmatpush1.msra.mxu0 0.0
    %280 = vmatprep.subr.mxu0 0.0
    %281 = vmatpush1.msra.mxu0 0.0
    %282 = vmatprep.mubr.f32.mxu0 0.0
    %283 = vmatmul.mubr.f32.gmra.mrb[0].mxu0 %v60
    %v284 = vpop.f32.mrb[0].mxu0
    %v285 = vadd.f32 %v138, %v284
    %v286 = vpop.f32.mrb[0].mxu0
    %v287 = vadd.f32 %v142, %v286
    %288 = vdwg.mxu0
    %v289 = vmax.f32 %v214, 0.0
    %v290 = vmax.f32 %v216, 0.0
    %v291 = vmax.f32 %v285, 0.0
    %v292 = vmax.f32 %v287, 0.0
    %v293 = vld [vmem:[#allocation7] sm:$0xff]
    %v294 = vld [vmem:[#allocation7 + $0x8] sm:$0xff]
    %v295 = vld [vmem:[#allocation7 + $0x10] sm:$0xff]
    %v296 = vld [vmem:[#allocation7 + $0x18] sm:$0xff]
    %v297 = vld [vmem:[#allocation7 + $0x20] sm:$0xff]
    %v298 = vld [vmem:[#allocation7 + $0x28] sm:$0xff]
    %v299 = vld [vmem:[#allocation7 + $0x30] sm:$0xff]
    %v300 = vld [vmem:[#allocation7 + $0x38] sm:$0xff]
    %v301 = vld [vmem:[#allocation7 + $0x40] sm:$0xff]
    %v302 = vld [vmem:[#allocation7 + $0x48] sm:$0xff]
    %v303 = vld [vmem:[#allocation7 + $0x50] sm:$0xff]
    %v304 = vld [vmem:[#allocation7 + $0x58] sm:$0xff]
    %v305 = vld [vmem:[#allocation7 + $0x60] sm:$0xff]
    %v306 = vld [vmem:[#allocation7 + $0x68] sm:$0xff]
    %v307 = vld [vmem:[#allocation7 + $0x70] sm:$0xff]
    %v308 = vld [vmem:[#allocation7 + $0x78] sm:$0xff]
    %v309 = vld [vmem:[#allocation7 + $0x80] sm:$0xff]
    %v310 = vld [vmem:[#allocation7 + $0x88] sm:$0xff]
    %v311 = vld [vmem:[#allocation7 + $0x90] sm:$0xff]
    %v312 = vld [vmem:[#allocation7 + $0x98] sm:$0xff]
    %v313 = vld [vmem:[#allocation7 + $0xa0] sm:$0xff]
    %v314 = vld [vmem:[#allocation7 + $0xa8] sm:$0xff]
    %v315 = vld [vmem:[#allocation7 + $0xb0] sm:$0xff]
    %v316 = vld [vmem:[#allocation7 + $0xb8] sm:$0xff]
    %v317 = vld [vmem:[#allocation7 + $0xc0] sm:$0xff]
    %v318 = vld [vmem:[#allocation7 + $0xc8] sm:$0xff]
    %v319 = vld [vmem:[#allocation7 + $0xd0] sm:$0xff]
    %v320 = vld [vmem:[#allocation7 + $0xd8] sm:$0xff]
    %v321 = vld [vmem:[#allocation7 + $0xe0] sm:$0xff]
    %v322 = vld [vmem:[#allocation7 + $0xe8] sm:$0xff]
    %v323 = vld [vmem:[#allocation7 + $0xf0] sm:$0xff]
    %v324 = vld [vmem:[#allocation7 + $0xf8] sm:$0xff]
    %v325 = vld [vmem:[#allocation7 + $0x100] sm:$0xff]
    %v326 = vld [vmem:[#allocation7 + $0x108] sm:$0xff]
    %v327 = vld [vmem:[#allocation7 + $0x110] sm:$0xff]
    %v328 = vld [vmem:[#allocation7 + $0x118] sm:$0xff]
    %v329 = vld [vmem:[#allocation7 + $0x120] sm:$0xff]
    %v330 = vld [vmem:[#allocation7 + $0x128] sm:$0xff]
    %v331 = vld [vmem:[#allocation7 + $0x130] sm:$0xff]
    %v332 = vld [vmem:[#allocation7 + $0x138] sm:$0xff]
    %v333 = vld [vmem:[#allocation7 + $0x140] sm:$0xff]
    %v334 = vld [vmem:[#allocation7 + $0x148] sm:$0xff]
    %v335 = vld [vmem:[#allocation7 + $0x150] sm:$0xff]
    %v336 = vld [vmem:[#allocation7 + $0x158] sm:$0xff]
    %v337 = vld [vmem:[#allocation7 + $0x160] sm:$0xff]
    %v338 = vld [vmem:[#allocation7 + $0x168] sm:$0xff]
    %v339 = vld [vmem:[#allocation7 + $0x170] sm:$0xff]
    %v340 = vld [vmem:[#allocation7 + $0x178] sm:$0xff]
    %v341 = vld [vmem:[#allocation7 + $0x180] sm:$0xff]
    %v342 = vld [vmem:[#allocation7 + $0x188] sm:$0xff]
    %v343 = vld [vmem:[#allocation7 + $0x190] sm:$0xff]
    %v344 = vld [vmem:[#allocation7 + $0x198] sm:$0xff]
    %v345 = vld [vmem:[#allocation7 + $0x1a0] sm:$0xff]
    %v346 = vld [vmem:[#allocation7 + $0x1a8] sm:$0xff]
    %v347 = vld [vmem:[#allocation7 + $0x1b0] sm:$0xff]
    %v348 = vld [vmem:[#allocation7 + $0x1b8] sm:$0xff]
    %v349 = vld [vmem:[#allocation7 + $0x1c0] sm:$0xff]
    %v350 = vld [vmem:[#allocation7 + $0x1c8] sm:$0xff]
    %v351 = vld [vmem:[#allocation7 + $0x1d0] sm:$0xff]
    %v352 = vld [vmem:[#allocation7 + $0x1d8] sm:$0xff]
    %v353 = vld [vmem:[#allocation7 + $0x1e0] sm:$0xff]
    %v354 = vld [vmem:[#allocation7 + $0x1e8] sm:$0xff]
    %v355 = vld [vmem:[#allocation7 + $0x1f0] sm:$0xff]
    %v356 = vld [vmem:[#allocation7 + $0x1f8] sm:$0xff]
    %v357 = vld [vmem:[%s4] sm:$0x1]
    %v359 = vlaneseq
    %v360 = vshrl.u32 %v359, 7
    %v361 = vsub.s32 0, %v360
    %v362 = vrot.slane %v357, %v361
    %364 = vmatprep.subr.mxu0 0.0
    %365 = vmatpush1.msra.mxu0 %v293
    %366 = vmatprep.subr.mxu0 0.0
    %367 = vmatpush1.msra.mxu0 %v294
    %368 = vmatprep.subr.mxu0 0.0
    %369 = vmatpush1.msra.mxu0 %v295
    %370 = vmatprep.subr.mxu0 0.0
    %371 = vmatpush1.msra.mxu0 %v296
    %372 = vmatprep.subr.mxu0 0.0
    %373 = vmatpush1.msra.mxu0 %v297
    %374 = vmatprep.subr.mxu0 0.0
    %375 = vmatpush1.msra.mxu0 %v298
    %376 = vmatprep.subr.mxu0 0.0
    %377 = vmatpush1.msra.mxu0 %v299
    %378 = vmatprep.subr.mxu0 0.0
    %379 = vmatpush1.msra.mxu0 %v300
    %380 = vmatprep.subr.mxu0 0.0
    %381 = vmatpush1.msra.mxu0 %v301
    %382 = vmatprep.subr.mxu0 0.0
    %383 = vmatpush1.msra.mxu0 %v302
    %384 = vmatprep.subr.mxu0 0.0
    %385 = vmatpush1.msra.mxu0 %v303
    %386 = vmatprep.subr.mxu0 0.0
    %387 = vmatpush1.msra.mxu0 %v304
    %388 = vmatprep.subr.mxu0 0.0
    %389 = vmatpush1.msra.mxu0 %v305
    %390 = vmatprep.subr.mxu0 0.0
    %391 = vmatpush1.msra.mxu0 %v306
    %392 = vmatprep.subr.mxu0 0.0
    %393 = vmatpush1.msra.mxu0 %v307
    %394 = vmatprep.subr.mxu0 0.0
    %395 = vmatpush1.msra.mxu0 %v308
    %396 = vmatprep.subr.mxu0 0.0
    %397 = vmatpush1.msra.mxu0 %v309
    %398 = vmatprep.subr.mxu0 0.0
    %399 = vmatpush1.msra.mxu0 %v310
    %400 = vmatprep.subr.mxu0 0.0
    %401 = vmatpush1.msra.mxu0 %v311
    %402 = vmatprep.subr.mxu0 0.0
    %403 = vmatpush1.msra.mxu0 %v312
    %404 = vmatprep.subr.mxu0 0.0
    %405 = vmatpush1.msra.mxu0 %v313
    %406 = vmatprep.subr.mxu0 0.0
    %407 = vmatpush1.msra.mxu0 %v314
    %408 = vmatprep.subr.mxu0 0.0
    %409 = vmatpush1.msra.mxu0 %v315
    %410 = vmatprep.subr.mxu0 0.0
    %411 = vmatpush1.msra.mxu0 %v316
    %412 = vmatprep.subr.mxu0 0.0
    %413 = vmatpush1.msra.mxu0 %v317
    %414 = vmatprep.subr.mxu0 0.0
    %415 = vmatpush1.msra.mxu0 %v318
    %416 = vmatprep.subr.mxu0 0.0
    %417 = vmatpush1.msra.mxu0 %v319
    %418 = vmatprep.subr.mxu0 0.0
    %419 = vmatpush1.msra.mxu0 %v320
    %420 = vmatprep.subr.mxu0 0.0
    %421 = vmatpush1.msra.mxu0 %v321
    %422 = vmatprep.subr.mxu0 0.0
    %423 = vmatpush1.msra.mxu0 %v322
    %424 = vmatprep.subr.mxu0 0.0
    %425 = vmatpush1.msra.mxu0 %v323
    %426 = vmatprep.subr.mxu0 0.0
    %427 = vmatpush1.msra.mxu0 %v324
    %428 = vmatprep.mubr.f32.mxu0 %v290
    %429 = vmatmul.mubr.f32.gmra.mrb[0].mxu0 %v289
    %v430 = vpop.f32.mrb[0].mxu0
    %v431 = vadd.f32 %v362, %v430
    %v432 = vpop.f32.mrb[0].mxu0
    %433 = vdwg.mxu0
    %434 = vmatprep.subr.mxu0 0.0
    %435 = vmatpush1.msra.mxu0 %v325
    %436 = vmatprep.subr.mxu0 0.0
    %437 = vmatpush1.msra.mxu0 %v326
    %438 = vmatprep.subr.mxu0 0.0
    %439 = vmatpush1.msra.mxu0 %v327
    %440 = vmatprep.subr.mxu0 0.0
    %441 = vmatpush1.msra.mxu0 %v328
    %442 = vmatprep.subr.mxu0 0.0
    %443 = vmatpush1.msra.mxu0 %v329
    %444 = vmatprep.subr.mxu0 0.0
    %445 = vmatpush1.msra.mxu0 %v330
    %446 = vmatprep.subr.mxu0 0.0
    %447 = vmatpush1.msra.mxu0 %v331
    %448 = vmatprep.subr.mxu0 0.0
    %449 = vmatpush1.msra.mxu0 %v332
    %450 = vmatprep.subr.mxu0 0.0
    %451 = vmatpush1.msra.mxu0 %v333
    %452 = vmatprep.subr.mxu0 0.0
    %453 = vmatpush1.msra.mxu0 %v334
    %454 = vmatprep.subr.mxu0 0.0
    %455 = vmatpush1.msra.mxu0 %v335
    %456 = vmatprep.subr.mxu0 0.0
    %457 = vmatpush1.msra.mxu0 %v336
    %458 = vmatprep.subr.mxu0 0.0
    %459 = vmatpush1.msra.mxu0 %v337
    %460 = vmatprep.subr.mxu0 0.0
    %461 = vmatpush1.msra.mxu0 %v338
    %462 = vmatprep.subr.mxu0 0.0
    %463 = vmatpush1.msra.mxu0 %v339
    %464 = vmatprep.subr.mxu0 0.0
    %465 = vmatpush1.msra.mxu0 %v340
    %466 = vmatprep.subr.mxu0 0.0
    %467 = vmatpush1.msra.mxu0 %v341
    %468 = vmatprep.subr.mxu0 0.0
    %469 = vmatpush1.msra.mxu0 %v342
    %470 = vmatprep.subr.mxu0 0.0
    %471 = vmatpush1.msra.mxu0 %v343
    %472 = vmatprep.subr.mxu0 0.0
    %473 = vmatpush1.msra.mxu0 %v344
    %474 = vmatprep.subr.mxu0 0.0
    %475 = vmatpush1.msra.mxu0 %v345
    %476 = vmatprep.subr.mxu0 0.0
    %477 = vmatpush1.msra.mxu0 %v346
    %478 = vmatprep.subr.mxu0 0.0
    %479 = vmatpush1.msra.mxu0 %v347
    %480 = vmatprep.subr.mxu0 0.0
    %481 = vmatpush1.msra.mxu0 %v348
    %482 = vmatprep.subr.mxu0 0.0
    %483 = vmatpush1.msra.mxu0 %v349
    %484 = vmatprep.subr.mxu0 0.0
    %485 = vmatpush1.msra.mxu0 %v350
    %486 = vmatprep.subr.mxu0 0.0
    %487 = vmatpush1.msra.mxu0 %v351
    %488 = vmatprep.subr.mxu0 0.0
    %489 = vmatpush1.msra.mxu0 %v352
    %490 = vmatprep.subr.mxu0 0.0
    %491 = vmatpush1.msra.mxu0 %v353
    %492 = vmatprep.subr.mxu0 0.0
    %493 = vmatpush1.msra.mxu0 %v354
    %494 = vmatprep.subr.mxu0 0.0
    %495 = vmatpush1.msra.mxu0 %v355
    %496 = vmatprep.subr.mxu0 0.0
    %497 = vmatpush1.msra.mxu0 %v356
    %498 = vmatprep.mubr.f32.mxu0 %v292
    %499 = vmatmul.mubr.f32.gmra.mrb[0].mxu0 %v291
    %v500 = vpop.f32.mrb[0].mxu0
    %v501 = vadd.f32 %v431, %v500
    %v502 = vpop.f32.mrb[0].mxu0
    %503 = vdwg.mxu0
    %504 = vst [vmem:[#allocation8] sm:$0xff] %v501
    // Predicated region
    $region34: #{tpu_custom_call.1} parent=1 // pred_check
      _
    $region35: #{tpu_custom_call.1} parent=1 // pred_check_branch
      %506 = sbr.rel (0) target = $region37
    $region36: #{tpu_custom_call.1} parent=1 // pred_region
      %s508 = ssub.s32 128, 128
      %509 = vsyncadd [#allocation4], %s508
      %s511 = sshll.u32 [#allocation8], 4
      %s512 = int_to_ptr.vmem [resolvable:$true] %s511
      %514 = dma.vmem_to_hbm [thread:$0]  %s512, 128, %s5, [#allocation4]
    $region37: #{tpu_custom_call.1} parent=1 // pred_fallthru
      _
    // Predicated region
    $region38: #{tpu_custom_call.1} parent=1 // pred_check
      _
    $region39: #{tpu_custom_call.1} parent=1 // pred_check_branch
      %516 = sbr.rel (0) target = $region41
    $region40: #{tpu_custom_call.1} parent=1 // pred_region
      %517 = dma.done [#allocation4], 128
    $region41: #{tpu_custom_call.1} parent=1 // pred_fallthru
      _
    %518 = vsyncpa [#allocation3], 1
    %519 = vsyncpa [#allocation6], 1
    %520 = vsyncpa [#allocation4], 1

</llo_original>
